<compile_context>
chip_gen: v5e
topology: v5e:2x2
jax: 0.10.0
libtpu: 0.0.40
codegen_flags: <defaults>
</compile_context>

<pallas_src>
import math

import jax
import jax.numpy as jnp
from jax.experimental import pallas as pl
from jax.experimental.pallas import tpu as pltpu


# ---------------------------- Pallas kernel ----------------------------

def _concater_kernel(x_ref, w_ref, b_ref, o_ref):
    """One (tm, H+N) output tile:  out = concat([x, silu(x @ w + b)], -1)."""
    H = x_ref.shape[1]
    x = x_ref[...]                                         # (tm, H), native dtype

    # MXU: native-dtype operands, f32 accumulation (no pre-upcast).
    y = jnp.dot(x, w_ref[...], preferred_element_type=jnp.float32)
    y = y + b_ref[...].astype(jnp.float32)                 # (tm, N), f32
    y = y * jax.nn.sigmoid(y)                              # SiLU (EUP sigmoid)

    # Fused concatenation: both halves are 128-lane aligned -> two unmasked
    # lane-dense stores into the (tm, H + N) block.
    o_ref[:, :H] = x
    o_ref[:, H:] = y.astype(o_ref.dtype)


def concater_forward(x, w, b, *, tile_rows=512):
    """Concater(pointwise Linear+SiLU, dim=-1).

    x: (..., H);  w: (H, N);  b: (N,).  Returns (..., H + N).
    """
    *lead, H = x.shape
    N = w.shape[1]
    M = math.prod(lead) if lead else 1
    x2 = x.reshape(M, H)

    # Row tile: large enough to amortize per-step overhead; multiple of 32 so
    # the same block shape is sublane-legal for f32/bf16/int8 inputs.  Small
    # inputs get one full-extent block (always legal) -> never pad on host.
    if M <= tile_rows:
        tm = M
    else:
        tm = max(32, (tile_rows // 32) * 32)
    grid = (pl.cdiv(M, tm),)

    x_bytes = jnp.dtype(x.dtype).itemsize
    w_bytes = jnp.dtype(w.dtype).itemsize
    cost = pl.CostEstimate(
        flops=2 * M * H * N,
        transcendentals=M * N,                             # sigmoid
        bytes_accessed=x_bytes * (M * H + M * (H + N)) + w_bytes * (H * N + N),
    )

    out = pl.pallas_call(
        _concater_kernel,
        out_shape=jax.ShapeDtypeStruct((M, H + N), x.dtype),
        grid=grid,
        in_specs=[
            pl.BlockSpec((tm, H), lambda i: (i, 0)),        # x row tile
            pl.BlockSpec((H, N), lambda i: (0, 0)),         # weight, VMEM-resident
            pl.BlockSpec((1, N), lambda i: (0, 0)),         # bias,   VMEM-resident
        ],
        out_specs=pl.BlockSpec((tm, H + N), lambda i: (i, 0)),
        compiler_params=pltpu.CompilerParams(
            dimension_semantics=("parallel",)),             # megacore on v7x
        cost_estimate=cost,
    )(x2, w, b.reshape(1, N))

    return out.reshape(*lead, H + N)


# ------------------------------ reference ------------------------------

def _reference(x, w, b):
    y = x.astype(jnp.float32) @ w.astype(jnp.float32) + b.astype(jnp.float32)
    y = y * jax.nn.sigmoid(y)
    return jnp.concatenate([x, y.astype(x.dtype)], axis=-1)


# -------------------------------- driver --------------------------------

if __name__ == "__main__":
    key = jax.random.PRNGKey(0)
    kx, kw, kb, kx2 = jax.random.split(key, 4)

    # Small shapes consistent with the module's channels-last usage.
    B, S, H = 2, 8, 128
    x = jax.random.normal(kx, (B, S, H), jnp.float32)
    w = 0.02 * jax.random.normal(kw, (H, H), jnp.float32)
    b = 0.02 * jax.random.normal(kb, (H,), jnp.float32)

    out = jax.block_until_ready(concater_forward(x, w, b))
    ref = _reference(x, w, b)
    assert out.shape == (B, S, 2 * H), out.shape
    assert bool(jnp.all(jnp.isfinite(out)))
    assert float(jnp.max(jnp.abs(out - ref))) < 1e-4

    # Exercise the tiled (grid > 1) path, including the ragged last block that
    # Pallas masks in-kernel (no jnp.pad / extra HBM copy in the wrapper).
    M2 = 1040                                   # 512 + 512 + 16 (ragged tail)
    x_big = jax.random.normal(kx2, (M2, H), jnp.float32)
    out_big = jax.block_until_ready(concater_forward(x_big, w, b))
    ref_big = _reference(x_big, w, b)
    assert out_big.shape == (M2, 2 * H), out_big.shape
    assert float(jnp.max(jnp.abs(out_big - ref_big))) < 1e-4

    print("KERNEL_OK")
</pallas_src>

<mosaic_0001>
module attributes {stable_mosaic.version = 11 : i64} {
  func.func @_concater_kernel(%arg0: i32, %arg1: memref<16x128xf32, #tpu.memory_space<vmem>>, %arg2: memref<128x128xf32, #tpu.memory_space<vmem>>, %arg3: memref<1x128xf32, #tpu.memory_space<vmem>>, %arg4: memref<16x256xf32, #tpu.memory_space<vmem>>) attributes {dimension_semantics = [#tpu.dimension_semantics<parallel>], iteration_bounds = array<i64: 1>, scalar_prefetch = 0 : i64, scratch_operands = 0 : i64, tpu.core_type = #tpu.core_type<tc>, window_params = [{transform_indices = @transform_0, window_bounds = array<i64: 16, 128>}, {pipeline_mode = #tpu.pipeline_mode<synchronous>, transform_indices = @transform_1, window_bounds = array<i64: 128, 128>}, {pipeline_mode = #tpu.pipeline_mode<synchronous>, transform_indices = @transform_2, window_bounds = array<i64: 1, 128>}, {transform_indices = @transform_3, window_bounds = array<i64: 16, 256>}]} {
    %c0 = arith.constant 0 : index
    %c0_0 = arith.constant 0 : index
    %0 = vector.load %arg1[%c0, %c0_0] : memref<16x128xf32, #tpu.memory_space<vmem>>, vector<16x128xf32>
    %c0_1 = arith.constant 0 : index
    %c0_2 = arith.constant 0 : index
    %1 = vector.load %arg2[%c0_1, %c0_2] : memref<128x128xf32, #tpu.memory_space<vmem>>, vector<128x128xf32>
    %cst = arith.constant dense<0.000000e+00> : vector<16x128xf32>
    %2 = tpu.matmul %0, %1, %cst {dimension_numbers = #tpu.dot_dimension_numbers<[1], [0], [0], [1], [0, 0, 1, 1], [], []>} : vector<16x128xf32>, vector<128x128xf32>, vector<16x128xf32> -> vector<16x128xf32>
    %c0_3 = arith.constant 0 : index
    %c0_4 = arith.constant 0 : index
    %3 = vector.load %arg3[%c0_3, %c0_4] : memref<1x128xf32, #tpu.memory_space<vmem>>, vector<1x128xf32>
    %4 = vector.broadcast %3 : vector<1x128xf32> to vector<16x128xf32>
    %5 = arith.addf %2, %4 : vector<16x128xf32>
    %6 = arith.negf %5 : vector<16x128xf32>
    %7 = math.exp %6 : vector<16x128xf32>
    %cst_5 = arith.constant 1.000000e+00 : f32
    %8 = vector.broadcast %cst_5 : f32 to vector<16x128xf32>
    %9 = arith.addf %8, %7 : vector<16x128xf32>
    %10 = arith.divf %8, %9 : vector<16x128xf32>
    %11 = arith.mulf %5, %10 : vector<16x128xf32>
    %c0_6 = arith.constant 0 : index
    %c0_7 = arith.constant 0 : index
    %12 = vector.load %arg4[%c0_6, %c0_7] : memref<16x256xf32, #tpu.memory_space<vmem>>, vector<16x128xf32>
    tpu.vector_store %arg4[%c0_6, %c0_7], %0 {strides = array<i32>} : memref<16x256xf32, #tpu.memory_space<vmem>>, vector<16x128xf32>,
    %c0_8 = arith.constant 0 : index
    %c128 = arith.constant 128 : index
    %13 = vector.load %arg4[%c0_8, %c128] : memref<16x256xf32, #tpu.memory_space<vmem>>, vector<16x128xf32>
    tpu.vector_store %arg4[%c0_8, %c128], %11 {strides = array<i32>} : memref<16x256xf32, #tpu.memory_space<vmem>>, vector<16x128xf32>,
    return
  }
  func.func @transform_0(%arg0: i32) -> (i32, i32) {
    %c0_i32 = arith.constant 0 : i32
    %c0_i32_0 = arith.constant 0 : i32
    return %arg0, %c0_i32 : i32, i32
  }
  func.func @transform_1(%arg0: i32) -> (i32, i32) {
    %c0_i32 = arith.constant 0 : i32
    %c0_i32_0 = arith.constant 0 : i32
    %c0_i32_1 = arith.constant 0 : i32
    return %c0_i32, %c0_i32_0 : i32, i32
  }
  func.func @transform_2(%arg0: i32) -> (i32, i32) {
    %c0_i32 = arith.constant 0 : i32
    %c0_i32_0 = arith.constant 0 : i32
    %c0_i32_1 = arith.constant 0 : i32
    return %c0_i32, %c0_i32_0 : i32, i32
  }
  func.func @transform_3(%arg0: i32) -> (i32, i32) {
    %c0_i32 = arith.constant 0 : i32
    %c0_i32_0 = arith.constant 0 : i32
    return %arg0, %c0_i32 : i32, i32
  }
}

</mosaic_0001>

<llo_original>
// kernel: tpu_custom_call.1
$region0: #{tpu_custom_call.1}
  #allocation0 [shape = 'u32[]', space=smem, size = 0x4, offset = 0x4, fixed_abs, tag = 'smem constant byte address 0x4 - core index']
  #allocation1 [shape = 'u32[72,128]{1,0:T(1,128)}', space=vmem, size = 0x9000, scoped, tag = 'internal scratch']
  %s0 = inlined_call_operand.hbm [shape: f32[16,128], index: 0, kind: input, shape index: {}]
  %s1 = inlined_call_operand.hbm [shape: f32[128,128], index: 1, kind: input, shape index: {}]
  %s2 = inlined_call_operand.vmem [shape: f32[1,128], index: 2, kind: input, shape index: {}]
  %s3 = inlined_call_operand.hbm [shape: f32[16,256], index: 3, kind: output, shape index: {}]
  %s4 = sld [smem:[#allocation0]]
  $region30: #{tpu_custom_call.1} parent=0
    _
  %s6 = ssub.s32 1, %s4
  %s7 = scalar_select 0, %s6, %s4
  $region1: #{tpu_custom_call.1} parent=0
    #allocation2 [shape = 'u8[8192]{0}', space=vmem, size = 0x2000, scoped, tag = 'input window, operand 0, single buffered']
    #allocation3 [shape = 's32[1]{0}', space=sflag, size = 0x4, scoped, tag = 'scoped memory for tpu_custom_call.1']
    #allocation4 [shape = 's32[1]{0}', space=sflag, size = 0x4, scoped, tag = 'scoped memory for tpu_custom_call.1']
    #allocation5 [shape = 'u8[65536]{0}', space=vmem, size = 0x10000, scoped, tag = 'input window, operand 1, single buffered']
    #allocation6 [shape = 's32[1]{0}', space=sflag, size = 0x4, scoped, tag = 'scoped memory for tpu_custom_call.1']
    #allocation7 [shape = 'u8[16384]{0}', space=vmem, size = 0x4000, scoped, tag = 'output window, operand 0, single buffered']
    %8 = vsyncpa [#allocation3], 0
    %9 = vsyncpa [#allocation6], 0
    %10 = vsyncpa [#allocation4], 0
    // Predicated region
    $region2: #{tpu_custom_call.1} parent=1 // pred_check
      _
    $region3: #{tpu_custom_call.1} parent=1 // pred_check_branch
      %12 = sbr.rel (0) target = $region5
    $region4: #{tpu_custom_call.1} parent=1 // pred_region
      %14 = vsyncadd [#allocation3], 0
      %s15 = sshll.u32 %s0, 4
      %s16 = int_to_ptr.hbm [resolvable:$true] %s15
      %s17 = sshll.u32 [#allocation2], 4
      %s18 = int_to_ptr.vmem [resolvable:$true] %s17
      %23 = dma.hbm_to_vmem [thread:$0]  %s16, 256, %s18, [#allocation3], 128, 128, 8
    $region5: #{tpu_custom_call.1} parent=1 // pred_fallthru
      _
    // Predicated region
    $region6: #{tpu_custom_call.1} parent=1 // pred_check
      _
    $region7: #{tpu_custom_call.1} parent=1 // pred_check_branch
      %25 = sbr.rel (0) target = $region9
    $region8: #{tpu_custom_call.1} parent=1 // pred_region
      %27 = vsyncadd [#allocation6], 0
      %s28 = sshll.u32 %s1, 4
      %s29 = int_to_ptr.hbm [resolvable:$true] %s28
      %s30 = sshll.u32 [#allocation5], 4
      %s31 = int_to_ptr.vmem [resolvable:$true] %s30
      %36 = dma.hbm_to_vmem [thread:$0]  %s29, 2048, %s31, [#allocation6], 128, 128, 8
    $region9: #{tpu_custom_call.1} parent=1 // pred_fallthru
      _
    // Predicated region
    $region10: #{tpu_custom_call.1} parent=1 // pred_check
      _
    $region11: #{tpu_custom_call.1} parent=1 // pred_check_branch
      %38 = sbr.rel (0) target = $region13
    $region12: #{tpu_custom_call.1} parent=1 // pred_region
      _
    $region13: #{tpu_custom_call.1} parent=1 // pred_fallthru
      _
    // Predicated region
    $region14: #{tpu_custom_call.1} parent=1 // pred_check
      _
    $region15: #{tpu_custom_call.1} parent=1 // pred_check_branch
      %40 = sbr.rel (0) target = $region17
    $region16: #{tpu_custom_call.1} parent=1 // pred_region
      %42 = dma.done [#allocation3], 256
    $region17: #{tpu_custom_call.1} parent=1 // pred_fallthru
      _
    // Predicated region
    $region18: #{tpu_custom_call.1} parent=1 // pred_check
      _
    $region19: #{tpu_custom_call.1} parent=1 // pred_check_branch
      %44 = sbr.rel (0) target = $region21
    $region20: #{tpu_custom_call.1} parent=1 // pred_region
      %46 = dma.done [#allocation6], 2048
    $region21: #{tpu_custom_call.1} parent=1 // pred_fallthru
      _
    %v47 = vld [vmem:[#allocation2] sm:$0xff]
    %v48 = vld [vmem:[#allocation2 + $0x8] sm:$0xff]
    %v49 = vld [vmem:[#allocation5] sm:$0xff]
    %v50 = vld [vmem:[#allocation5 + $0x8] sm:$0xff]
    %v51 = vld [vmem:[#allocation5 + $0x10] sm:$0xff]
    %v52 = vld [vmem:[#allocation5 + $0x18] sm:$0xff]
    %v53 = vld [vmem:[#allocation5 + $0x20] sm:$0xff]
    %v54 = vld [vmem:[#allocation5 + $0x28] sm:$0xff]
    %v55 = vld [vmem:[#allocation5 + $0x30] sm:$0xff]
    %v56 = vld [vmem:[#allocation5 + $0x38] sm:$0xff]
    %v57 = vld [vmem:[#allocation5 + $0x40] sm:$0xff]
    %v58 = vld [vmem:[#allocation5 + $0x48] sm:$0xff]
    %v59 = vld [vmem:[#allocation5 + $0x50] sm:$0xff]
    %v60 = vld [vmem:[#allocation5 + $0x58] sm:$0xff]
    %v61 = vld [vmem:[#allocation5 + $0x60] sm:$0xff]
    %v62 = vld [vmem:[#allocation5 + $0x68] sm:$0xff]
    %v63 = vld [vmem:[#allocation5 + $0x70] sm:$0xff]
    %v64 = vld [vmem:[#allocation5 + $0x78] sm:$0xff]
    %v65 = vld [vmem:[%s2] sm:$0x1]
    %v67 = vperm.slane %v65, 0
    %69 = vmatpush.msra.mxu0 %v64
    %70 = vmatpush.msra.mxu0 %v63
    %71 = vmatpush.msra.mxu0 %v62
    %72 = vmatpush.msra.mxu0 %v61
    %73 = vmatpush.msra.mxu0 %v60
    %74 = vmatpush.msra.mxu0 %v59
    %75 = vmatpush.msra.mxu0 %v58
    %76 = vmatpush.msra.mxu0 %v57
    %77 = vmatpush.msra.mxu0 %v56
    %78 = vmatpush.msra.mxu0 %v55
    %79 = vmatpush.msra.mxu0 %v54
    %80 = vmatpush.msra.mxu0 %v53
    %81 = vmatpush.msra.mxu0 %v52
    %82 = vmatpush.msra.mxu0 %v51
    %83 = vmatpush.msra.mxu0 %v50
    %84 = vmatpush.msra.mxu0 %v49
    %85 = vmatmul.f32.gmra.mxu0 %v47
    %v86 = vpop.f32.mrf.mxu0
    %v87 = vadd.f32 %v67, %v86
    %88 = vmatmul.f32.gmra.mxu0 %v48
    %v89 = vpop.f32.mrf.mxu0
    %v90 = vadd.f32 %v67, %v89
    %91 = vdwg.mxu0
    %v92 = vxor.u32 %v87, 2147483648
    %v93 = vxor.u32 %v90, 2147483648
    %v94 = vmul.f32 %v92, 1.442695
    %v95 = vpow.pop %v94
    %v96 = vmul.f32 %v93, 1.442695
    %v97 = vpow.pop %v96
    %v98 = vadd.f32 %v95, 1.0
    %v99 = vadd.f32 %v97, 1.0
    %v100 = vrcp.pop %v98
    %v101 = vmul.f32 %v98, %v100
    %v102 = vsub.f32 1.0, %v101
    %v103 = vmul.f32 %v100, %v102
    %v104 = vadd.f32 %v100, %v103
    %vm105 = vweird.f32 %v98
    %vm106 = vweird.f32 %v100
    %vm107 = vmor %vm105, %vm106
    %v108 = vsel %vm107, %v100, %v104
    %v109 = vand.u32 2147483647, %v98
    %vm110 = vcmp.eq.f32.partialorder %v109, 8.507059e+37
    %v111 = vand.u32 %v98, 2147483648
    %v112 = vor.u32 1.1754944e-38, %v111
    %v113 = vsel %vm110, %v112, %v108
    %v114 = vmul.f32 1.0, %v113
    %v115 = vrcp.pop %v99
    %v116 = vmul.f32 %v99, %v115
    %v117 = vsub.f32 1.0, %v116
    %v118 = vmul.f32 %v115, %v117
    %v119 = vadd.f32 %v115, %v118
    %vm120 = vweird.f32 %v99
    %vm121 = vweird.f32 %v115
    %vm122 = vmor %vm120, %vm121
    %v123 = vsel %vm122, %v115, %v119
    %v124 = vand.u32 2147483647, %v99
    %vm125 = vcmp.eq.f32.partialorder %v124, 8.507059e+37
    %v126 = vand.u32 %v99, 2147483648
    %v127 = vor.u32 1.1754944e-38, %v126
    %v128 = vsel %vm125, %v127, %v123
    %v129 = vmul.f32 1.0, %v128
    %v130 = vmul.f32 %v87, %v114
    %v131 = vmul.f32 %v90, %v129
    %132 = vst [vmem:[#allocation7] sm:$0xff] %v47
    %133 = vst [vmem:[#allocation7 + $0x10] sm:$0xff] %v48
    %134 = vst [vmem:[#allocation7 + $0x8] sm:$0xff] %v130
    %135 = vst [vmem:[#allocation7 + $0x18] sm:$0xff] %v131
    // Predicated region
    $region22: #{tpu_custom_call.1} parent=1 // pred_check
      _
    $region23: #{tpu_custom_call.1} parent=1 // pred_check_branch
      %137 = sbr.rel (0) target = $region25
    $region24: #{tpu_custom_call.1} parent=1 // pred_region
      %139 = vsyncadd [#allocation4], 0
      %s140 = sshll.u32 [#allocation7], 4
      %s141 = int_to_ptr.vmem [resolvable:$true] %s140
      %s142 = sshll.u32 %s3, 4
      %s143 = int_to_ptr.hbm [resolvable:$true] %s142
      %148 = dma.vmem_to_hbm [thread:$0]  %s141, 512, %s143, [#allocation4], 256, 256, 16
    $region25: #{tpu_custom_call.1} parent=1 // pred_fallthru
      _
    // Predicated region
    $region26: #{tpu_custom_call.1} parent=1 // pred_check
      _
    $region27: #{tpu_custom_call.1} parent=1 // pred_check_branch
      %150 = sbr.rel (0) target = $region29
    $region28: #{tpu_custom_call.1} parent=1 // pred_region
      %152 = dma.done [#allocation4], 512
    $region29: #{tpu_custom_call.1} parent=1 // pred_fallthru
      _
    %153 = vsyncpa [#allocation3], 1
    %154 = vsyncpa [#allocation6], 1
    %155 = vsyncpa [#allocation4], 1

</llo_original>
